<compile_context>
chip_gen: v7x
topology: tpu7x:2x2x1
jax: 0.10.0
libtpu: 0.0.40
codegen_flags: <defaults>
</compile_context>

<pallas_src>
import functools
import math

import numpy as np
import jax
import jax.numpy as jnp
from jax import lax
from jax.experimental import pallas as pl
from jax.experimental.pallas import tpu as pltpu

SQ2 = math.sqrt(2.0)
PAD = 4  # top/left padding; the level-3 filter reaches offsets -4..+3

_HAS_RECIP = hasattr(pl, "reciprocal")

# Full-scale taps (used only by the pure-JAX reference).
LO1 = (SQ2, SQ2)
HI1 = (SQ2, -SQ2)
LO2 = (SQ2, SQ2, SQ2, SQ2)
HI2 = (SQ2, SQ2, -SQ2, -SQ2)
LO3 = (SQ2,) * 8
HI3 = (SQ2,) * 4 + (-SQ2,) * 4


def _round_up(x, m):
    return (x + m - 1) // m * m


def _shift_up(x, s, axis):
    """out[..., i, ...] = x[..., (i + s) mod n, ...]  (s: static python int >= 0)."""
    if s == 0:
        return x
    n = x.shape[axis]
    return pltpu.roll(x, (n - s) % n, axis)


def haarpsi_kernel(xm_ref, xh_ref, ym_ref, yh_ref, num_ref, den_ref, *,
                   H, W, tile_h, a, c_eff):
    t = pl.program_id(0)
    Wp = xm_ref.shape[1]
    cc = c_eff * c_eff
    G = tile_h // 8  # number of 8-row output groups in this stripe

    def haar_bank(img):
        """Anchored (top-left) Haar responses, +-1 taps, dyadic cascade.

        Returns ((A0_1, A0_2, A0_3), (A1_1, A1_2, A1_3)) where index 0 is
        high-pass rows / low-pass cols and index 1 is low-pass rows / high-pass cols.
        The level-k response for image pixel (i, j) lives at slab index
        (i + s_k, j + s_k) with s_1 = 3, s_2 = 2, s_3 = 0.
        """
        # Column (lane) cascade — XLU rolls + VPU adds only.
        r = _shift_up(img, 1, 1)
        cL1, cH1 = img + r, img - r
        r = _shift_up(cL1, 2, 1)
        cL2, cH2 = cL1 + r, cL1 - r
        r = _shift_up(cL2, 4, 1)
        cL3, cH3 = cL2 + r, cL2 - r

        # Row (sublane) cascade applied to the matching column output.
        def row_lo(x, lvl):
            y = x + _shift_up(x, 1, 0)
            if lvl >= 2:
                y = y + _shift_up(y, 2, 0)
            if lvl >= 3:
                y = y + _shift_up(y, 4, 0)
            return y

        def row_hi(x, lvl):
            if lvl == 1:
                return x - _shift_up(x, 1, 0)
            y = x + _shift_up(x, 1, 0)
            if lvl == 3:
                y = y + _shift_up(y, 2, 0)
                return y - _shift_up(y, 4, 0)
            return y - _shift_up(y, 2, 0)

        a0 = (row_hi(cL1, 1), row_hi(cL2, 2), row_hi(cL3, 3))   # axis-0 set
        a1 = (row_lo(cH1, 1), row_lo(cH2, 2), row_lo(cH3, 3))   # axis-1 set
        return a0, a1

    def score(fx, fy):
        # |fx*fy| == |fx|*|fy| bit-exactly, and fx*fx needs no abs -> 2 fewer VALU
        # ops per call.  Exact reciprocal (EUP rcp + refinement) instead of a divide.
        num = 2.0 * jnp.abs(fx * fy) + cc
        den = fx * fx + fy * fy + cc
        inv = pl.reciprocal(den, approx=False) if _HAS_RECIP else 1.0 / den
        return num * inv

    def align(m, s):
        # Bring a level-k anchored map to the pixel frame: out[i, j] = m[i+s, j+s].
        return _shift_up(_shift_up(m, s, 0), s, 1)

    def sim_and_w(fx, fy):
        s1 = align(score(fx[0], fy[0]), 3)
        s2 = align(score(fx[1], fy[1]), 2)
        # sigmoid(a*(s1+s2)/2) == 0.5 + 0.5*tanh(a*(s1+s2)/4): one EUP tanh,
        # no exp, no divide.  Mathematically identical to the logistic l_a.
        sim = 0.5 + 0.5 * jnp.tanh((0.25 * a) * (s1 + s2))
        w = jnp.maximum(jnp.abs(fx[2]), jnp.abs(fy[2]))          # level-3 weight map
        return sim, w

    def masked_maps(xs, ys, row_lim):
        """Per-pixel (sim*w, w) maps for a slab, zeroed outside the valid image."""
        L = xs.shape[0]
        x0, x1 = haar_bank(xs)
        y0, y1 = haar_bank(ys)
        sim0, w0 = sim_and_w(x0, y0)
        sim1, w1 = sim_and_w(x1, y1)
        rows = lax.broadcasted_iota(jnp.int32, (L, Wp), 0)
        cols = lax.broadcasted_iota(jnp.int32, (L, Wp), 1)
        # One grid-dependent compare (row) + one compile-time-constant compare (col).
        valid = (rows < row_lim) & (cols < W)
        nm = jnp.where(valid, sim0 * w0 + sim1 * w1, 0.0)
        dm = jnp.where(valid, w0 + w1, 0.0)
        return nm, dm

    # Main slab: the (tile_h, Wp) block itself (padded rows [t*tile_h, (t+1)*tile_h)).
    # Its outputs are only used for stripe-local rows < tile_h - 8; the last 7 rows
    # are contaminated by roll wraparound and are never folded.
    numA, denA = masked_maps(xm_ref[...], ym_ref[...], H - t * tile_h)

    # Seam slab: last 8 rows of the main block (static, sublane-aligned slice) plus
    # the 8-row halo block -> (16, Wp).  Its rows 0..7 are stripe-local rows
    # tile_h-8 .. tile_h-1 and read at most 7 rows below them (< 16, no wraparound).
    xB = jnp.concatenate([xm_ref[pl.ds(tile_h - 8, 8), :], xh_ref[...]], axis=0)
    yB = jnp.concatenate([ym_ref[pl.ds(tile_h - 8, 8), :], yh_ref[...]], axis=0)
    numB, denB = masked_maps(xB, yB, H - t * tile_h - (tile_h - 8))

    def fold(mA, mB):
        # (tile_h, Wp) + (16, Wp) -> lane-dense (8, Wp) partial sums using only
        # sublane-tile-aligned static slices.  Groups 0..G-2 come from the main slab,
        # the last group from the seam slab.
        acc = mB[0:8, :]
        for k in range(G - 1):
            acc = acc + mA[k * 8:(k + 1) * 8, :]
        return acc

    num_ref[0] = fold(numA, numB)
    den_ref[0] = fold(denA, denB)


def _vmem_capacity_bytes():
    try:
        info = pltpu.get_tpu_info()
        cap = int(getattr(info, "vmem_capacity_bytes", 0))
    except Exception:
        cap = 0
    if cap < 16 * 2**20:
        cap = 64 * 2**20  # conservative default (v7x per-core)
    return cap


def _vmem_budget(vmem_cap):
    """vmem_limit_bytes to request: 16 MiB headroom on 64-MiB parts (v7x),
    7/8 of capacity on 128-MiB parts (v5e/v6e)."""
    if vmem_cap <= 80 * 2**20:
        return max(vmem_cap - 16 * 2**20, 16 * 2**20)
    return vmem_cap * 7 // 8


def _pick_tile_h(H, Wp, vmem_cap):
    small_vmem = vmem_cap <= 80 * 2**20          # v7x-class: 64 MiB / core
    limit = _vmem_budget(vmem_cap)
    bytes_per_row = 4 * Wp
    live_slabs = 20   # concurrent (rows, Wp) f32 temporaries in the cascade/score pipeline
    pipe_bufs = 4     # 2 images x 2 auto-pipeline buffers of the main BlockSpec window
    reserve = 4 * 2**20   # halo/output blocks + compiler-internal scratch
    rows = (limit - reserve) // ((live_slabs + pipe_bufs) * bytes_per_row)
    cap_rows = 256 if small_vmem else 512        # higher cap on 128-MiB parts
    tile = max(8, min(cap_rows, (int(rows) // 8) * 8))
    if small_vmem:
        # v7x has 2 TensorCores per chip: keep >= 2 stripes so the "parallel"
        # stripe axis actually shards across them.
        tile = min(tile, max(8, _round_up(-(-H // 2), 8)))
    return min(tile, _round_up(H, 8))


def haarpsi(x, y, a, c, *, tile_h=None):
    """Pallas HaarPSI; returns a scalar float32 (same semantics as the torch module)."""
    H, W = x.shape
    a = float(a)
    c = float(c)

    vmem_cap = _vmem_capacity_bytes()
    Wp = _round_up(W + 2 * PAD, 128)         # lane-dense padded width
    if tile_h is None:
        tile_h = _pick_tile_h(H, Wp, vmem_cap)
    n_tiles = -(-H // tile_h)
    Hp = n_tiles * tile_h + 8                # includes the 8-row halo of the last stripe

    # Invariants the in-kernel roll/masking logic relies on:
    #   * 4 rows/cols of top/left zero padding (level-3 filter reach is -4..+3),
    #   * >= 8 spare columns so no valid pixel's cascade wraps around in the lane dim,
    #   * an 8-row halo (level-3 slab reach below a pixel is +7 < 8),
    #   * stripe height a multiple of 8 (sublane tile) and Wp a multiple of 128 (lane).
    assert PAD == 4 and Wp >= W + 2 * PAD and Wp % 128 == 0
    assert tile_h % 8 == 0 and tile_h >= 8 and Hp >= H + 2 * PAD

    # TODO(synk): the zero-pad below is one un-overlapped image-sized HBM write+read
    # per image; removing it requires clipped manual DMA (and giving up the
    # parallel-safe automatic pipeline), so it is kept for now.
    pad_spec = ((PAD, Hp - PAD - H), (PAD, Wp - PAD - W))
    xp = jnp.pad(x.astype(jnp.float32), pad_spec)
    yp = jnp.pad(y.astype(jnp.float32), pad_spec)

    kernel = functools.partial(haarpsi_kernel, H=H, W=W, tile_h=tile_h,
                               a=a, c_eff=0.5 * c)   # c/2 compensates the +-1 taps

    main_spec = pl.BlockSpec((tile_h, Wp), lambda t: (t, 0))
    halo_spec = pl.BlockSpec((8, Wp), lambda t: ((t + 1) * (tile_h // 8), 0))
    out_spec = pl.BlockSpec((1, 8, Wp), lambda t: (t, 0, 0))

    num_part, den_part = pl.pallas_call(
        kernel,
        out_shape=(jax.ShapeDtypeStruct((n_tiles, 8, Wp), jnp.float32),
                   jax.ShapeDtypeStruct((n_tiles, 8, Wp), jnp.float32)),
        grid=(n_tiles,),
        in_specs=[main_spec, halo_spec, main_spec, halo_spec],
        out_specs=(out_spec, out_spec),
        compiler_params=pltpu.CompilerParams(
            dimension_semantics=("parallel",),
            vmem_limit_bytes=int(_vmem_budget(vmem_cap))),
    )(xp, xp, yp, yp)

    numer = jnp.sum(num_part)
    denom = jnp.sum(den_part)
    r = numer / denom
    # Final scalar glue (inverse logistic), a handful of flops in plain JAX.
    return (jnp.log(r / (1.0 - r)) / a) ** 2


# ---------------- pure-JAX reference (mirrors the torch module) --------------
def _conv2d(img, ker, pad):
    out = lax.conv_general_dilated(
        img[None, None], ker[None, None], (1, 1),
        [(pad, pad), (pad, pad)],
        dimension_numbers=("NCHW", "OIHW", "NCHW"))
    return out[0, 0]


def haarpsi_ref(x, y, a, c):
    lo1, hi1 = jnp.array(LO1), jnp.array(HI1)
    lo2, hi2 = jnp.array(LO2), jnp.array(HI2)
    lo3, hi3 = jnp.array(LO3), jnp.array(HI3)
    c2 = c * c

    def score(fx, fy):
        fx, fy = jnp.abs(fx), jnp.abs(fy)
        return (2 * fx * fy + c2) / (fx * fx + fy * fy + c2)

    def sim_and_weight(u1, v1, u2, v2, u3, v3):
        f1, f2, f3 = jnp.outer(u1, v1), jnp.outer(u2, v2), jnp.outer(u3, v3)
        cx1 = _conv2d(x, f1, 1)[:-1, :-1];   cy1 = _conv2d(y, f1, 1)[:-1, :-1]
        cx2 = _conv2d(x, f2, 3)[1:-2, 1:-2]; cy2 = _conv2d(y, f2, 3)[1:-2, 1:-2]
        cx3 = _conv2d(x, f3, 7)[3:-4, 3:-4]; cy3 = _conv2d(y, f3, 7)[3:-4, 3:-4]
        sim = jax.nn.sigmoid(a * (score(cx1, cy1) + score(cx2, cy2)) / 2)
        w = jnp.maximum(jnp.abs(cx3), jnp.abs(cy3))
        return sim, w

    sim0, w0 = sim_and_weight(hi1, lo1, hi2, lo2, hi3, lo3)
    sim1, w1 = sim_and_weight(lo1, hi1, lo2, hi2, lo3, hi3)
    numer = jnp.sum(sim0 * w0 + sim1 * w1)
    denom = jnp.sum(w0 + w1)
    r = numer / denom
    return (jnp.log(r / (1 - r)) / a) ** 2


if __name__ == "__main__":
    key = jax.random.PRNGKey(0)

    def run_case(H, W, a, c, tile_h=None, seed=0):
        kx, ky = jax.random.split(jax.random.fold_in(key, seed))
        x = jax.random.normal(kx, (H, W), jnp.float32)
        y = x + 0.1 * jax.random.normal(ky, (H, W), jnp.float32)
        out = haarpsi(x, y, a, c, tile_h=tile_h)
        jax.block_until_ready(out)
        ref = haarpsi_ref(x, y, a, c)
        np.testing.assert_allclose(np.asarray(out), np.asarray(ref),
                                   rtol=1e-3, atol=1e-4)

    # Deterministic "parameters" (torch: a ~ U(0.5, 5) learnable, c = init_c > 0).
    run_case(16, 16, a=4.2, c=0.3)                     # small image, auto tiling
    run_case(70, 200, a=1.7, c=0.8, tile_h=24, seed=1)  # multi-stripe, ragged last stripe
    run_case(96, 384, a=3.0, c=0.5, tile_h=48, seed=2)  # multi-stripe, multiple lane blocks

    print("KERNEL_OK")
</pallas_src>

<mosaic_0001>
module attributes {stable_mosaic.version = 11 : i64} {
  func.func @haarpsi_kernel(%arg0: i32, %arg1: memref<8x128xf32, #tpu.memory_space<vmem>>, %arg2: memref<8x128xf32, #tpu.memory_space<vmem>>, %arg3: memref<8x128xf32, #tpu.memory_space<vmem>>, %arg4: memref<8x128xf32, #tpu.memory_space<vmem>>, %arg5: memref<1x8x128xf32, #tpu.memory_space<vmem>>, %arg6: memref<1x8x128xf32, #tpu.memory_space<vmem>>) attributes {dimension_semantics = [#tpu.dimension_semantics<parallel>], iteration_bounds = array<i64: 2>, scalar_prefetch = 0 : i64, scratch_operands = 0 : i64, tpu.core_type = #tpu.core_type<tc>, window_params = [{transform_indices = @transform_0, window_bounds = array<i64: 8, 128>}, {transform_indices = @transform_1, window_bounds = array<i64: 8, 128>}, {transform_indices = @transform_2, window_bounds = array<i64: 8, 128>}, {transform_indices = @transform_3, window_bounds = array<i64: 8, 128>}, {transform_indices = @transform_4, window_bounds = array<i64: 1, 8, 128>}, {transform_indices = @transform_5, window_bounds = array<i64: 1, 8, 128>}]} {
    %c0 = arith.constant 0 : index
    %c0_0 = arith.constant 0 : index
    %0 = vector.load %arg1[%c0, %c0_0] : memref<8x128xf32, #tpu.memory_space<vmem>>, vector<8x128xf32>
    %c0_1 = arith.constant 0 : index
    %c0_2 = arith.constant 0 : index
    %1 = vector.load %arg2[%c0_1, %c0_2] : memref<8x128xf32, #tpu.memory_space<vmem>>, vector<8x128xf32>
    %2 = tpu.concatenate %0, %1 in 0 : vector<8x128xf32>, vector<8x128xf32> -> vector<16x128xf32>
    %c0_3 = arith.constant 0 : index
    %c0_4 = arith.constant 0 : index
    %3 = vector.load %arg3[%c0_3, %c0_4] : memref<8x128xf32, #tpu.memory_space<vmem>>, vector<8x128xf32>
    %c0_5 = arith.constant 0 : index
    %c0_6 = arith.constant 0 : index
    %4 = vector.load %arg4[%c0_5, %c0_6] : memref<8x128xf32, #tpu.memory_space<vmem>>, vector<8x128xf32>
    %5 = tpu.concatenate %3, %4 in 0 : vector<8x128xf32>, vector<8x128xf32> -> vector<16x128xf32>
    %c8_i32 = arith.constant 8 : i32
    %6 = arith.muli %arg0, %c8_i32 : i32
    %c16_i32 = arith.constant 16 : i32
    %7 = arith.subi %c16_i32, %6 : i32
    %c0_i32 = arith.constant 0 : i32
    %8 = arith.subi %7, %c0_i32 : i32
    %c127_i32 = arith.constant 127 : i32
    %9 = tpu.dynamic_rotate %2 by %c127_i32 dim 1 : vector<16x128xf32>, i32 -> vector<16x128xf32>
    %10 = arith.addf %2, %9 : vector<16x128xf32>
    %11 = arith.subf %2, %9 : vector<16x128xf32>
    %c126_i32 = arith.constant 126 : i32
    %12 = tpu.dynamic_rotate %10 by %c126_i32 dim 1 : vector<16x128xf32>, i32 -> vector<16x128xf32>
    %13 = arith.addf %10, %12 : vector<16x128xf32>
    %14 = arith.subf %10, %12 : vector<16x128xf32>
    %c124_i32 = arith.constant 124 : i32
    %15 = tpu.dynamic_rotate %13 by %c124_i32 dim 1 : vector<16x128xf32>, i32 -> vector<16x128xf32>
    %16 = arith.addf %13, %15 : vector<16x128xf32>
    %17 = arith.subf %13, %15 : vector<16x128xf32>
    %c15_i32 = arith.constant 15 : i32
    %18 = tpu.dynamic_rotate %10 by %c15_i32 dim 0 : vector<16x128xf32>, i32 -> vector<16x128xf32>
    %19 = arith.subf %10, %18 : vector<16x128xf32>
    %c15_i32_7 = arith.constant 15 : i32
    %20 = tpu.dynamic_rotate %13 by %c15_i32_7 dim 0 : vector<16x128xf32>, i32 -> vector<16x128xf32>
    %21 = arith.addf %13, %20 : vector<16x128xf32>
    %c14_i32 = arith.constant 14 : i32
    %22 = tpu.dynamic_rotate %21 by %c14_i32 dim 0 : vector<16x128xf32>, i32 -> vector<16x128xf32>
    %23 = arith.subf %21, %22 : vector<16x128xf32>
    %c15_i32_8 = arith.constant 15 : i32
    %24 = tpu.dynamic_rotate %16 by %c15_i32_8 dim 0 : vector<16x128xf32>, i32 -> vector<16x128xf32>
    %25 = arith.addf %16, %24 : vector<16x128xf32>
    %c14_i32_9 = arith.constant 14 : i32
    %26 = tpu.dynamic_rotate %25 by %c14_i32_9 dim 0 : vector<16x128xf32>, i32 -> vector<16x128xf32>
    %27 = arith.addf %25, %26 : vector<16x128xf32>
    %c12_i32 = arith.constant 12 : i32
    %28 = tpu.dynamic_rotate %27 by %c12_i32 dim 0 : vector<16x128xf32>, i32 -> vector<16x128xf32>
    %29 = arith.subf %27, %28 : vector<16x128xf32>
    %c15_i32_10 = arith.constant 15 : i32
    %30 = tpu.dynamic_rotate %11 by %c15_i32_10 dim 0 : vector<16x128xf32>, i32 -> vector<16x128xf32>
    %31 = arith.addf %11, %30 : vector<16x128xf32>
    %c15_i32_11 = arith.constant 15 : i32
    %32 = tpu.dynamic_rotate %14 by %c15_i32_11 dim 0 : vector<16x128xf32>, i32 -> vector<16x128xf32>
    %33 = arith.addf %14, %32 : vector<16x128xf32>
    %c14_i32_12 = arith.constant 14 : i32
    %34 = tpu.dynamic_rotate %33 by %c14_i32_12 dim 0 : vector<16x128xf32>, i32 -> vector<16x128xf32>
    %35 = arith.addf %33, %34 : vector<16x128xf32>
    %c15_i32_13 = arith.constant 15 : i32
    %36 = tpu.dynamic_rotate %17 by %c15_i32_13 dim 0 : vector<16x128xf32>, i32 -> vector<16x128xf32>
    %37 = arith.addf %17, %36 : vector<16x128xf32>
    %c14_i32_14 = arith.constant 14 : i32
    %38 = tpu.dynamic_rotate %37 by %c14_i32_14 dim 0 : vector<16x128xf32>, i32 -> vector<16x128xf32>
    %39 = arith.addf %37, %38 : vector<16x128xf32>
    %c12_i32_15 = arith.constant 12 : i32
    %40 = tpu.dynamic_rotate %39 by %c12_i32_15 dim 0 : vector<16x128xf32>, i32 -> vector<16x128xf32>
    %41 = arith.addf %39, %40 : vector<16x128xf32>
    %c127_i32_16 = arith.constant 127 : i32
    %42 = tpu.dynamic_rotate %5 by %c127_i32_16 dim 1 : vector<16x128xf32>, i32 -> vector<16x128xf32>
    %43 = arith.addf %5, %42 : vector<16x128xf32>
    %44 = arith.subf %5, %42 : vector<16x128xf32>
    %c126_i32_17 = arith.constant 126 : i32
    %45 = tpu.dynamic_rotate %43 by %c126_i32_17 dim 1 : vector<16x128xf32>, i32 -> vector<16x128xf32>
    %46 = arith.addf %43, %45 : vector<16x128xf32>
    %47 = arith.subf %43, %45 : vector<16x128xf32>
    %c124_i32_18 = arith.constant 124 : i32
    %48 = tpu.dynamic_rotate %46 by %c124_i32_18 dim 1 : vector<16x128xf32>, i32 -> vector<16x128xf32>
    %49 = arith.addf %46, %48 : vector<16x128xf32>
    %50 = arith.subf %46, %48 : vector<16x128xf32>
    %c15_i32_19 = arith.constant 15 : i32
    %51 = tpu.dynamic_rotate %43 by %c15_i32_19 dim 0 : vector<16x128xf32>, i32 -> vector<16x128xf32>
    %52 = arith.subf %43, %51 : vector<16x128xf32>
    %c15_i32_20 = arith.constant 15 : i32
    %53 = tpu.dynamic_rotate %46 by %c15_i32_20 dim 0 : vector<16x128xf32>, i32 -> vector<16x128xf32>
    %54 = arith.addf %46, %53 : vector<16x128xf32>
    %c14_i32_21 = arith.constant 14 : i32
    %55 = tpu.dynamic_rotate %54 by %c14_i32_21 dim 0 : vector<16x128xf32>, i32 -> vector<16x128xf32>
    %56 = arith.subf %54, %55 : vector<16x128xf32>
    %c15_i32_22 = arith.constant 15 : i32
    %57 = tpu.dynamic_rotate %49 by %c15_i32_22 dim 0 : vector<16x128xf32>, i32 -> vector<16x128xf32>
    %58 = arith.addf %49, %57 : vector<16x128xf32>
    %c14_i32_23 = arith.constant 14 : i32
    %59 = tpu.dynamic_rotate %58 by %c14_i32_23 dim 0 : vector<16x128xf32>, i32 -> vector<16x128xf32>
    %60 = arith.addf %58, %59 : vector<16x128xf32>
    %c12_i32_24 = arith.constant 12 : i32
    %61 = tpu.dynamic_rotate %60 by %c12_i32_24 dim 0 : vector<16x128xf32>, i32 -> vector<16x128xf32>
    %62 = arith.subf %60, %61 : vector<16x128xf32>
    %c15_i32_25 = arith.constant 15 : i32
    %63 = tpu.dynamic_rotate %44 by %c15_i32_25 dim 0 : vector<16x128xf32>, i32 -> vector<16x128xf32>
    %64 = arith.addf %44, %63 : vector<16x128xf32>
    %c15_i32_26 = arith.constant 15 : i32
    %65 = tpu.dynamic_rotate %47 by %c15_i32_26 dim 0 : vector<16x128xf32>, i32 -> vector<16x128xf32>
    %66 = arith.addf %47, %65 : vector<16x128xf32>
    %c14_i32_27 = arith.constant 14 : i32
    %67 = tpu.dynamic_rotate %66 by %c14_i32_27 dim 0 : vector<16x128xf32>, i32 -> vector<16x128xf32>
    %68 = arith.addf %66, %67 : vector<16x128xf32>
    %c15_i32_28 = arith.constant 15 : i32
    %69 = tpu.dynamic_rotate %50 by %c15_i32_28 dim 0 : vector<16x128xf32>, i32 -> vector<16x128xf32>
    %70 = arith.addf %50, %69 : vector<16x128xf32>
    %c14_i32_29 = arith.constant 14 : i32
    %71 = tpu.dynamic_rotate %70 by %c14_i32_29 dim 0 : vector<16x128xf32>, i32 -> vector<16x128xf32>
    %72 = arith.addf %70, %71 : vector<16x128xf32>
    %c12_i32_30 = arith.constant 12 : i32
    %73 = tpu.dynamic_rotate %72 by %c12_i32_30 dim 0 : vector<16x128xf32>, i32 -> vector<16x128xf32>
    %74 = arith.addf %72, %73 : vector<16x128xf32>
    %75 = arith.mulf %19, %52 : vector<16x128xf32>
    %76 = math.absf %75 : vector<16x128xf32>
    %cst = arith.constant 2.000000e+00 : f32
    %77 = vector.broadcast %cst : f32 to vector<16x128xf32>
    %78 = arith.mulf %77, %76 : vector<16x128xf32>
    %cst_31 = arith.constant 2.250000e-02 : f32
    %79 = vector.broadcast %cst_31 : f32 to vector<16x128xf32>
    %80 = arith.addf %78, %79 : vector<16x128xf32>
    %81 = arith.mulf %19, %19 : vector<16x128xf32>
    %82 = arith.mulf %52, %52 : vector<16x128xf32>
    %83 = arith.addf %81, %82 : vector<16x128xf32>
    %cst_32 = arith.constant 2.250000e-02 : f32
    %84 = vector.broadcast %cst_32 : f32 to vector<16x128xf32>
    %85 = arith.addf %83, %84 : vector<16x128xf32>
    %86 = tpu.reciprocal %85 : vector<16x128xf32> -> vector<16x128xf32>
    %87 = arith.mulf %80, %86 : vector<16x128xf32>
    %c13_i32 = arith.constant 13 : i32
    %88 = tpu.dynamic_rotate %87 by %c13_i32 dim 0 : vector<16x128xf32>, i32 -> vector<16x128xf32>
    %c125_i32 = arith.constant 125 : i32
    %89 = tpu.dynamic_rotate %88 by %c125_i32 dim 1 : vector<16x128xf32>, i32 -> vector<16x128xf32>
    %90 = arith.mulf %23, %56 : vector<16x128xf32>
    %91 = math.absf %90 : vector<16x128xf32>
    %cst_33 = arith.constant 2.000000e+00 : f32
    %92 = vector.broadcast %cst_33 : f32 to vector<16x128xf32>
    %93 = arith.mulf %92, %91 : vector<16x128xf32>
    %cst_34 = arith.constant 2.250000e-02 : f32
    %94 = vector.broadcast %cst_34 : f32 to vector<16x128xf32>
    %95 = arith.addf %93, %94 : vector<16x128xf32>
    %96 = arith.mulf %23, %23 : vector<16x128xf32>
    %97 = arith.mulf %56, %56 : vector<16x128xf32>
    %98 = arith.addf %96, %97 : vector<16x128xf32>
    %cst_35 = arith.constant 2.250000e-02 : f32
    %99 = vector.broadcast %cst_35 : f32 to vector<16x128xf32>
    %100 = arith.addf %98, %99 : vector<16x128xf32>
    %101 = tpu.reciprocal %100 : vector<16x128xf32> -> vector<16x128xf32>
    %102 = arith.mulf %95, %101 : vector<16x128xf32>
    %c14_i32_36 = arith.constant 14 : i32
    %103 = tpu.dynamic_rotate %102 by %c14_i32_36 dim 0 : vector<16x128xf32>, i32 -> vector<16x128xf32>
    %c126_i32_37 = arith.constant 126 : i32
    %104 = tpu.dynamic_rotate %103 by %c126_i32_37 dim 1 : vector<16x128xf32>, i32 -> vector<16x128xf32>
    %105 = arith.addf %89, %104 : vector<16x128xf32>
    %cst_38 = arith.constant 1.050000e+00 : f32
    %106 = vector.broadcast %cst_38 : f32 to vector<16x128xf32>
    %107 = arith.mulf %106, %105 : vector<16x128xf32>
    %108 = math.tanh %107 : vector<16x128xf32>
    %cst_39 = arith.constant 5.000000e-01 : f32
    %109 = vector.broadcast %cst_39 : f32 to vector<16x128xf32>
    %110 = arith.mulf %109, %108 : vector<16x128xf32>
    %cst_40 = arith.constant 5.000000e-01 : f32
    %111 = vector.broadcast %cst_40 : f32 to vector<16x128xf32>
    %112 = arith.addf %111, %110 : vector<16x128xf32>
    %113 = math.absf %29 : vector<16x128xf32>
    %114 = math.absf %62 : vector<16x128xf32>
    %115 = arith.maximumf %113, %114 : vector<16x128xf32>
    %116 = arith.mulf %31, %64 : vector<16x128xf32>
    %117 = math.absf %116 : vector<16x128xf32>
    %cst_41 = arith.constant 2.000000e+00 : f32
    %118 = vector.broadcast %cst_41 : f32 to vector<16x128xf32>
    %119 = arith.mulf %118, %117 : vector<16x128xf32>
    %cst_42 = arith.constant 2.250000e-02 : f32
    %120 = vector.broadcast %cst_42 : f32 to vector<16x128xf32>
    %121 = arith.addf %119, %120 : vector<16x128xf32>
    %122 = arith.mulf %31, %31 : vector<16x128xf32>
    %123 = arith.mulf %64, %64 : vector<16x128xf32>
    %124 = arith.addf %122, %123 : vector<16x128xf32>
    %cst_43 = arith.constant 2.250000e-02 : f32
    %125 = vector.broadcast %cst_43 : f32 to vector<16x128xf32>
    %126 = arith.addf %124, %125 : vector<16x128xf32>
    %127 = tpu.reciprocal %126 : vector<16x128xf32> -> vector<16x128xf32>
    %128 = arith.mulf %121, %127 : vector<16x128xf32>
    %c13_i32_44 = arith.constant 13 : i32
    %129 = tpu.dynamic_rotate %128 by %c13_i32_44 dim 0 : vector<16x128xf32>, i32 -> vector<16x128xf32>
    %c125_i32_45 = arith.constant 125 : i32
    %130 = tpu.dynamic_rotate %129 by %c125_i32_45 dim 1 : vector<16x128xf32>, i32 -> vector<16x128xf32>
    %131 = arith.mulf %35, %68 : vector<16x128xf32>
    %132 = math.absf %131 : vector<16x128xf32>
    %cst_46 = arith.constant 2.000000e+00 : f32
    %133 = vector.broadcast %cst_46 : f32 to vector<16x128xf32>
    %134 = arith.mulf %133, %132 : vector<16x128xf32>
    %cst_47 = arith.constant 2.250000e-02 : f32
    %135 = vector.broadcast %cst_47 : f32 to vector<16x128xf32>
    %136 = arith.addf %134, %135 : vector<16x128xf32>
    %137 = arith.mulf %35, %35 : vector<16x128xf32>
    %138 = arith.mulf %68, %68 : vector<16x128xf32>
    %139 = arith.addf %137, %138 : vector<16x128xf32>
    %cst_48 = arith.constant 2.250000e-02 : f32
    %140 = vector.broadcast %cst_48 : f32 to vector<16x128xf32>
    %141 = arith.addf %139, %140 : vector<16x128xf32>
    %142 = tpu.reciprocal %141 : vector<16x128xf32> -> vector<16x128xf32>
    %143 = arith.mulf %136, %142 : vector<16x128xf32>
    %c14_i32_49 = arith.constant 14 : i32
    %144 = tpu.dynamic_rotate %143 by %c14_i32_49 dim 0 : vector<16x128xf32>, i32 -> vector<16x128xf32>
    %c126_i32_50 = arith.constant 126 : i32
    %145 = tpu.dynamic_rotate %144 by %c126_i32_50 dim 1 : vector<16x128xf32>, i32 -> vector<16x128xf32>
    %146 = arith.addf %130, %145 : vector<16x128xf32>
    %cst_51 = arith.constant 1.050000e+00 : f32
    %147 = vector.broadcast %cst_51 : f32 to vector<16x128xf32>
    %148 = arith.mulf %147, %146 : vector<16x128xf32>
    %149 = math.tanh %148 : vector<16x128xf32>
    %cst_52 = arith.constant 5.000000e-01 : f32
    %150 = vector.broadcast %cst_52 : f32 to vector<16x128xf32>
    %151 = arith.mulf %150, %149 : vector<16x128xf32>
    %cst_53 = arith.constant 5.000000e-01 : f32
    %152 = vector.broadcast %cst_53 : f32 to vector<16x128xf32>
    %153 = arith.addf %152, %151 : vector<16x128xf32>
    %154 = math.absf %41 : vector<16x128xf32>
    %155 = math.absf %74 : vector<16x128xf32>
    %156 = arith.maximumf %154, %155 : vector<16x128xf32>
    %157 = tpu.iota {dimensions = array<i32: 0>} : vector<16x128xi32>
    %158 = tpu.iota {dimensions = array<i32: 1>} : vector<16x128xi32>
    %159 = vector.broadcast %8 : i32 to vector<16x128xi32>
    %160 = arith.cmpi slt, %157, %159 : vector<16x128xi32>
    %c16_i32_54 = arith.constant 16 : i32
    %161 = vector.broadcast %c16_i32_54 : i32 to vector<16x128xi32>
    %162 = arith.cmpi slt, %158, %161 : vector<16x128xi32>
    %163 = arith.andi %160, %162 : vector<16x128xi1>
    %164 = arith.mulf %112, %115 : vector<16x128xf32>
    %165 = arith.mulf %153, %156 : vector<16x128xf32>
    %166 = arith.addf %164, %165 : vector<16x128xf32>
    %cst_55 = arith.constant 0.000000e+00 : f32
    %167 = vector.broadcast %cst_55 : f32 to vector<16x128xf32>
    %168 = arith.select %163, %166, %167 : vector<16x128xi1>, vector<16x128xf32>
    %169 = arith.addf %115, %156 : vector<16x128xf32>
    %cst_56 = arith.constant 0.000000e+00 : f32
    %170 = vector.broadcast %cst_56 : f32 to vector<16x128xf32>
    %171 = arith.select %163, %169, %170 : vector<16x128xi1>, vector<16x128xf32>
    %172 = vector.extract_strided_slice %168 {offsets = [0, 0], sizes = [8, 128], strides = [1, 1]} : vector<16x128xf32> to vector<8x128xf32>
    %c0_57 = arith.constant 0 : index
    %c0_58 = arith.constant 0 : index
    %c0_59 = arith.constant 0 : index
    %173 = vector.load %arg5[%c0_57, %c0_58, %c0_59] : memref<1x8x128xf32, #tpu.memory_space<vmem>>, vector<1x8x128xf32>
    %174 = vector.shape_cast %173 : vector<1x8x128xf32> to vector<8x128xf32>
    %175 = vector.shape_cast %172 : vector<8x128xf32> to vector<1x8x128xf32>
    tpu.vector_store %arg5[%c0_57, %c0_58, %c0_59], %175 {strides = array<i32>} : memref<1x8x128xf32, #tpu.memory_space<vmem>>, vector<1x8x128xf32>,
    %176 = vector.extract_strided_slice %171 {offsets = [0, 0], sizes = [8, 128], strides = [1, 1]} : vector<16x128xf32> to vector<8x128xf32>
    %c0_60 = arith.constant 0 : index
    %c0_61 = arith.constant 0 : index
    %c0_62 = arith.constant 0 : index
    %177 = vector.load %arg6[%c0_60, %c0_61, %c0_62] : memref<1x8x128xf32, #tpu.memory_space<vmem>>, vector<1x8x128xf32>
    %178 = vector.shape_cast %177 : vector<1x8x128xf32> to vector<8x128xf32>
    %179 = vector.shape_cast %176 : vector<8x128xf32> to vector<1x8x128xf32>
    tpu.vector_store %arg6[%c0_60, %c0_61, %c0_62], %179 {strides = array<i32>} : memref<1x8x128xf32, #tpu.memory_space<vmem>>, vector<1x8x128xf32>,
    return
  }
  func.func @transform_0(%arg0: i32) -> (i32, i32) {
    %c0_i32 = arith.constant 0 : i32
    %c0_i32_0 = arith.constant 0 : i32
    return %arg0, %c0_i32 : i32, i32
  }
  func.func @transform_1(%arg0: i32) -> (i32, i32) {
    %c1_i32 = arith.constant 1 : i32
    %0 = arith.addi %arg0, %c1_i32 : i32
    %c1_i32_0 = arith.constant 1 : i32
    %1 = arith.muli %0, %c1_i32_0 : i32
    %c0_i32 = arith.constant 0 : i32
    %c0_i32_1 = arith.constant 0 : i32
    return %1, %c0_i32 : i32, i32
  }
  func.func @transform_2(%arg0: i32) -> (i32, i32) {
    %c0_i32 = arith.constant 0 : i32
    %c0_i32_0 = arith.constant 0 : i32
    return %arg0, %c0_i32 : i32, i32
  }
  func.func @transform_3(%arg0: i32) -> (i32, i32) {
    %c1_i32 = arith.constant 1 : i32
    %0 = arith.addi %arg0, %c1_i32 : i32
    %c1_i32_0 = arith.constant 1 : i32
    %1 = arith.muli %0, %c1_i32_0 : i32
    %c0_i32 = arith.constant 0 : i32
    %c0_i32_1 = arith.constant 0 : i32
    return %1, %c0_i32 : i32, i32
  }
  func.func @transform_4(%arg0: i32) -> (i32, i32, i32) {
    %c0_i32 = arith.constant 0 : i32
    %c0_i32_0 = arith.constant 0 : i32
    %c0_i32_1 = arith.constant 0 : i32
    return %arg0, %c0_i32, %c0_i32_0 : i32, i32, i32
  }
  func.func @transform_5(%arg0: i32) -> (i32, i32, i32) {
    %c0_i32 = arith.constant 0 : i32
    %c0_i32_0 = arith.constant 0 : i32
    %c0_i32_1 = arith.constant 0 : i32
    return %arg0, %c0_i32, %c0_i32_0 : i32, i32, i32
  }
}

</mosaic_0001>

<llo_original>
// kernel: tpu_custom_call.1
$region0: #{tpu_custom_call.1}
  #allocation0 [shape = 'u32[]', space=smem, size = 0x4, offset = 0x4, fixed_abs, tag = 'smem constant byte address 0x4 - core index']
  #allocation1 [shape = 'u32[144,128]{1,0:T(1,128)}', space=vmem, size = 0x12000, scoped, tag = 'internal scratch']
  %s0 = inlined_call_operand.hbm [shape: f32[24,128], index: 0, kind: input, shape index: {}]
  %s1 = inlined_call_operand.hbm [shape: f32[24,128], index: 1, kind: input, shape index: {}]
  %s2 = inlined_call_operand.hbm [shape: f32[24,128], index: 2, kind: input, shape index: {}]
  %s3 = inlined_call_operand.hbm [shape: f32[24,128], index: 3, kind: input, shape index: {}]
  %s4 = inlined_call_operand.hbm [shape: f32[2,8,128], index: 4, kind: output, shape index: {0}]
  %s5 = inlined_call_operand.hbm [shape: f32[2,8,128], index: 5, kind: output, shape index: {1}]
  %6 = xla_tuple %s4, %s5
  %s7 = sld [smem:[#allocation0]]
  $region73: #{tpu_custom_call.1} parent=0
    _
  %s9 = ssub.s32 1, %s7
  %s10 = scalar_select 0, %s9, %s7
  $region1: #{tpu_custom_call.1} parent=0
    #allocation2 [shape = 'u8[8192]{0}', space=vmem, size = 0x2000, scoped, tag = 'input window, operand 0']
    #allocation3 [shape = 's32[2]{0}', space=sflag, size = 0x8, scoped, tag = 'scoped memory for tpu_custom_call.1']
    #allocation4 [shape = 's32[2]{0}', space=sflag, size = 0x8, scoped, tag = 'scoped memory for tpu_custom_call.1']
    #allocation5 [shape = 'u8[8192]{0}', space=vmem, size = 0x2000, scoped, tag = 'input window, operand 1']
    #allocation6 [shape = 's32[2]{0}', space=sflag, size = 0x8, scoped, tag = 'scoped memory for tpu_custom_call.1']
    #allocation7 [shape = 'u8[8192]{0}', space=vmem, size = 0x2000, scoped, tag = 'input window, operand 2']
    #allocation8 [shape = 'u8[8192]{0}', space=vmem, size = 0x2000, scoped, tag = 'input window, operand 3']
    #allocation9 [shape = 's32[2]{0}', space=sflag, size = 0x8, scoped, tag = 'scoped memory for tpu_custom_call.1']
    #allocation10 [shape = 'u8[8192]{0}', space=vmem, size = 0x2000, scoped, tag = 'output window, operand 0']
    #allocation11 [shape = 'u8[8192]{0}', space=vmem, size = 0x2000, scoped, tag = 'output window, operand 1']
    #allocation12 [shape = 's32[2]{0}', space=sflag, size = 0x8, scoped, tag = 'scoped memory for tpu_custom_call.1']
    %11 = vsyncpa [#allocation3], 0
    %s12 = scalar_lea.sflag [#allocation3], 1
    %13 = vsyncpa %s12, 0
    %14 = vsyncpa [#allocation6], 0
    %s15 = scalar_lea.sflag [#allocation6], 1
    %16 = vsyncpa %s15, 0
    %17 = vsyncpa [#allocation9], 0
    %s18 = scalar_lea.sflag [#allocation9], 1
    %19 = vsyncpa %s18, 0
    %20 = vsyncpa [#allocation4], 0
    %s21 = scalar_lea.sflag [#allocation4], 1
    %22 = vsyncpa %s21, 0
    %23 = vsyncpa [#allocation12], 0
    %s24 = scalar_lea.sflag [#allocation12], 1
    %25 = vsyncpa %s24, 0
    loop: start=0, step=1, limit=4
    $region2: #{tpu_custom_call.1} parent=1 // loop_pre_header
      _
    $region3: #{tpu_custom_call.1} parent=1 // loop_header
      %s27 = sphi 0, %s31
      %p28 = scmp.ge.s32.totalorder %s27, 4
      %s37 = sphi 0, %s39
      %s40 = sphi 0, %s37
      %s41 = sphi 0, %s40
      %s57 = sphi 0, %s41
      %s65 = sphi 0, %s67
      %s68 = sphi 0, %s65
      %s69 = sphi 0, %s68
      %s85 = sphi 0, %s69
      %s91 = sphi 0, %s93
      %s94 = sphi 0, %s91
      %s95 = sphi 0, %s94
      %s111 = sphi 0, %s95
      %s119 = sphi 0, %s121
      %s122 = sphi 0, %s119
      %s123 = sphi 0, %s122
      %s139 = sphi 0, %s123
      %s145 = sphi 0, %s147
      %s148 = sphi 0, %s145
      %s149 = sphi 0, %s148
      %s165 = sphi 0, %s149
      %s171 = sphi 0, %s173
      %s174 = sphi 0, %s171
      %s175 = sphi 0, %s174
      %s191 = sphi 0, %s175
    $region4: #{tpu_custom_call.1} parent=1 // loop_header_branch
      %30 = sbr.rel (%p28) target = $region8
    $region5: #{tpu_custom_call.1} parent=1 // loop_body
      %s32 = ssub.s32 %s27, 1
      %s33 = ssub.s32 %s27, 2
      %s34 = sadd.s32 %s27, 1
      %s35 = ssub.s32 %s27, %s34
      %p36 = scmp.eq.s32.totalorder %s35, 0
      %s38 = sadd.s32 %s37, 1
      %s39 = scalar_select %p36, %s37, %s38
      %p42 = pneg %p36
      %p43 = scmp.eq.s32.totalorder %s27, 1
      %p44 = por %p42, %p43
      %p45 = scmp.ne.s32.totalorder %s37, %s40
      %p46 = scmp.eq.s32.totalorder %s27, 0
      %p47 = por %p45, %p46
      %p48 = scmp.ne.s32.totalorder %s37, %s40
      %p49 = scmp.eq.s32.totalorder %s32, 1
      %p50 = por %p48, %p49
      %p51 = scmp.ne.s32.totalorder %s40, %s41
      %p52 = scmp.eq.s32.totalorder %s32, 0
      %p53 = por %p51, %p52
      %p54 = scmp.ne.s32.totalorder %s40, %s41
      %p55 = scmp.eq.s32.totalorder %s33, 1
      %p56 = por %p54, %p55
      %p58 = scmp.ne.s32.totalorder %s41, %s57
      %p59 = scmp.eq.s32.totalorder %s33, 0
      %p60 = por %p58, %p59
      %s61 = sadd.s32 %s27, 1
      %s62 = sadd.s32 %s34, 1
      %s63 = ssub.s32 %s61, %s62
      %p64 = scmp.eq.s32.totalorder %s63, 0
      %s66 = sadd.s32 %s65, 1
      %s67 = scalar_select %p64, %s65, %s66
      %p70 = pneg %p64
      %p71 = scmp.eq.s32.totalorder %s27, 1
      %p72 = por %p70, %p71
      %p73 = scmp.ne.s32.totalorder %s65, %s68
      %p74 = scmp.eq.s32.totalorder %s27, 0
      %p75 = por %p73, %p74
      %p76 = scmp.ne.s32.totalorder %s65, %s68
      %p77 = scmp.eq.s32.totalorder %s32, 1
      %p78 = por %p76, %p77
      %p79 = scmp.ne.s32.totalorder %s68, %s69
      %p80 = scmp.eq.s32.totalorder %s32, 0
      %p81 = por %p79, %p80
      %p82 = scmp.ne.s32.totalorder %s68, %s69
      %p83 = scmp.eq.s32.totalorder %s33, 1
      %p84 = por %p82, %p83
      %p86 = scmp.ne.s32.totalorder %s69, %s85
      %p87 = scmp.eq.s32.totalorder %s33, 0
      %p88 = por %p86, %p87
      %s89 = ssub.s32 %s27, %s34
      %p90 = scmp.eq.s32.totalorder %s89, 0
      %s92 = sadd.s32 %s91, 1
      %s93 = scalar_select %p90, %s91, %s92
      %p96 = pneg %p90
      %p97 = scmp.eq.s32.totalorder %s27, 1
      %p98 = por %p96, %p97
      %p99 = scmp.ne.s32.totalorder %s91, %s94
      %p100 = scmp.eq.s32.totalorder %s27, 0
      %p101 = por %p99, %p100
      %p102 = scmp.ne.s32.totalorder %s91, %s94
      %p103 = scmp.eq.s32.totalorder %s32, 1
      %p104 = por %p102, %p103
      %p105 = scmp.ne.s32.totalorder %s94, %s95
      %p106 = scmp.eq.s32.totalorder %s32, 0
      %p107 = por %p105, %p106
      %p108 = scmp.ne.s32.totalorder %s94, %s95
      %p109 = scmp.eq.s32.totalorder %s33, 1
      %p110 = por %p108, %p109
      %p112 = scmp.ne.s32.totalorder %s95, %s111
      %p113 = scmp.eq.s32.totalorder %s33, 0
      %p114 = por %p112, %p113
      %s115 = sadd.s32 %s27, 1
      %s116 = sadd.s32 %s34, 1
      %s117 = ssub.s32 %s115, %s116
      %p118 = scmp.eq.s32.totalorder %s117, 0
      %s120 = sadd.s32 %s119, 1
      %s121 = scalar_select %p118, %s119, %s120
      %p124 = pneg %p118
      %p125 = scmp.eq.s32.totalorder %s27, 1
      %p126 = por %p124, %p125
      %p127 = scmp.ne.s32.totalorder %s119, %s122
      %p128 = scmp.eq.s32.totalorder %s27, 0
      %p129 = por %p127, %p128
      %p130 = scmp.ne.s32.totalorder %s119, %s122
      %p131 = scmp.eq.s32.totalorder %s32, 1
      %p132 = por %p130, %p131
      %p133 = scmp.ne.s32.totalorder %s122, %s123
      %p134 = scmp.eq.s32.totalorder %s32, 0
      %p135 = por %p133, %p134
      %p136 = scmp.ne.s32.totalorder %s122, %s123
      %p137 = scmp.eq.s32.totalorder %s33, 1
      %p138 = por %p136, %p137
      %p140 = scmp.ne.s32.totalorder %s123, %s139
      %p141 = scmp.eq.s32.totalorder %s33, 0
      %p142 = por %p140, %p141
      %s143 = ssub.s32 %s27, %s34
      %p144 = scmp.eq.s32.totalorder %s143, 0
      %s146 = sadd.s32 %s145, 1
      %s147 = scalar_select %p144, %s145, %s146
      %p150 = pneg %p144
      %p151 = scmp.eq.s32.totalorder %s27, 1
      %p152 = por %p150, %p151
      %p153 = scmp.ne.s32.totalorder %s145, %s148
      %p154 = scmp.eq.s32.totalorder %s27, 0
      %p155 = por %p153, %p154
      %p156 = scmp.ne.s32.totalorder %s145, %s148
      %p157 = scmp.eq.s32.totalorder %s32, 1
      %p158 = por %p156, %p157
      %p159 = scmp.ne.s32.totalorder %s148, %s149
      %p160 = scmp.eq.s32.totalorder %s32, 0
      %p161 = por %p159, %p160
      %p162 = scmp.ne.s32.totalorder %s148, %s149
      %p163 = scmp.eq.s32.totalorder %s33, 1
      %p164 = por %p162, %p163
      %p166 = scmp.ne.s32.totalorder %s149, %s165
      %p167 = scmp.eq.s32.totalorder %s33, 0
      %p168 = por %p166, %p167
      %s169 = ssub.s32 %s27, %s34
      %p170 = scmp.eq.s32.totalorder %s169, 0
      %s172 = sadd.s32 %s171, 1
      %s173 = scalar_select %p170, %s171, %s172
      %p176 = pneg %p170
      %p177 = scmp.eq.s32.totalorder %s27, 1
      %p178 = por %p176, %p177
      %p179 = scmp.ne.s32.totalorder %s171, %s174
      %p180 = scmp.eq.s32.totalorder %s27, 0
      %p181 = por %p179, %p180
      %p182 = scmp.ne.s32.totalorder %s171, %s174
      %p183 = scmp.eq.s32.totalorder %s32, 1
      %p184 = por %p182, %p183
      %p185 = scmp.ne.s32.totalorder %s174, %s175
      %p186 = scmp.eq.s32.totalorder %s32, 0
      %p187 = por %p185, %p186
      %p188 = scmp.ne.s32.totalorder %s174, %s175
      %p189 = scmp.eq.s32.totalorder %s33, 1
      %p190 = por %p188, %p189
      %p192 = scmp.ne.s32.totalorder %s175, %s191
      %p193 = scmp.eq.s32.totalorder %s33, 0
      %p194 = por %p192, %p193
      %p195 = scmp.le.s32.totalorder 1, %s27
      %p196 = scmp.lt.s32.totalorder %s27, 3
      %p197 = pnand %p195, %p196
      %p198 = pneg %p197
      // Predicated region
      $region9: #{tpu_custom_call.1} parent=5 // pred_check
        _
      $region10: #{tpu_custom_call.1} parent=5 // pred_check_branch
        %200 = sbr.rel (%p197) target = $region12
      $region11: #{tpu_custom_call.1} parent=5 // pred_region
        %s201 = ssub.s32 %s27, 1
      $region12: #{tpu_custom_call.1} parent=5 // pred_fallthru
        _
      %p202 = scmp.lt.s32.totalorder %s27, 2
      // Predicated region
      $region13: #{tpu_custom_call.1} parent=5 // pred_check
        %p203 = pneg %p202
      $region14: #{tpu_custom_call.1} parent=5 // pred_check_branch
        %205 = sbr.rel (%p203) target = $region16
      $region15: #{tpu_custom_call.1} parent=5 // pred_region
        // Predicated region
        $region17: #{tpu_custom_call.1} parent=15 // pred_check
          %p206 = pneg %p47
        $region18: #{tpu_custom_call.1} parent=15 // pred_check_branch
          %208 = sbr.rel (%p206) target = $region20
        $region19: #{tpu_custom_call.1} parent=15 // pred_region
          %s209 = sand.u32 %s37, 1
          %s210 = scalar_lea.sflag [#allocation3], %s209
          %s211 = sand.u32 %s37, 1
          %s212 = smul.addr %s211, 8
          %s213 = scalar_lea.vmem [#allocation2], %s212
          %s215 = ssub.s32 128, 128
          %216 = vsyncadd %s210, %s215
          %s217 = smul.addr %s27, 128
          %s218 = scalar_lea.hbm %s0, %s217
          %s220 = sshll.u32 %s213, 4
          %s221 = int_to_ptr.vmem [resolvable:$true] %s220
          %223 = dma.hbm_to_vmem [thread:$0]  %s218, 128, %s221, %s210
        $region20: #{tpu_custom_call.1} parent=15 // pred_fallthru
          _
        // Predicated region
        $region21: #{tpu_custom_call.1} parent=15 // pred_check
          %p224 = pneg %p75
        $region22: #{tpu_custom_call.1} parent=15 // pred_check_branch
          %226 = sbr.rel (%p224) target = $region24
        $region23: #{tpu_custom_call.1} parent=15 // pred_region
          %s227 = sand.u32 %s27, 1
          %s228 = scalar_lea.sflag [#allocation6], %s227
          %s229 = sand.u32 %s65, 1
          %s230 = smul.addr %s229, 8
          %s231 = scalar_lea.vmem [#allocation5], %s230
          %s232 = sadd.s32 %s27, 1
          %s234 = ssub.s32 128, 128
          %235 = vsyncadd %s228, %s234
          %s236 = smul.addr %s232, 128
          %s237 = scalar_lea.hbm %s1, %s236
          %s239 = sshll.u32 %s231, 4
          %s240 = int_to_ptr.vmem [resolvable:$true] %s239
          %242 = dma.hbm_to_vmem [thread:$0]  %s237, 128, %s240, %s228
        $region24: #{tpu_custom_call.1} parent=15 // pred_fallthru
          _
        // Predicated region
        $region25: #{tpu_custom_call.1} parent=15 // pred_check
          %p243 = pneg %p101
        $region26: #{tpu_custom_call.1} parent=15 // pred_check_branch
          %245 = sbr.rel (%p243) target = $region28
        $region27: #{tpu_custom_call.1} parent=15 // pred_region
          %s246 = sand.u32 %s27, 1
          %s247 = scalar_lea.sflag [#allocation6], %s246
          %s248 = sand.u32 %s91, 1
          %s249 = smul.addr %s248, 8
          %s250 = scalar_lea.vmem [#allocation7], %s249
          %s252 = ssub.s32 128, 128
          %253 = vsyncadd %s247, %s252
          %s254 = smul.addr %s27, 128
          %s255 = scalar_lea.hbm %s2, %s254
          %s257 = sshll.u32 %s250, 4
          %s258 = int_to_ptr.vmem [resolvable:$true] %s257
          %260 = dma.hbm_to_vmem [thread:$0]  %s255, 128, %s258, %s247
        $region28: #{tpu_custom_call.1} parent=15 // pred_fallthru
          _
        // Predicated region
        $region29: #{tpu_custom_call.1} parent=15 // pred_check
          %p261 = pneg %p129
        $region30: #{tpu_custom_call.1} parent=15 // pred_check_branch
          %263 = sbr.rel (%p261) target = $region32
        $region31: #{tpu_custom_call.1} parent=15 // pred_region
          %s264 = sand.u32 %s119, 1
          %s265 = scalar_lea.sflag [#allocation9], %s264
          %s266 = sand.u32 %s119, 1
          %s267 = smul.addr %s266, 8
          %s268 = scalar_lea.vmem [#allocation8], %s267
          %s269 = sadd.s32 %s27, 1
          %s271 = ssub.s32 128, 128
          %272 = vsyncadd %s265, %s271
          %s273 = smul.addr %s269, 128
          %s274 = scalar_lea.hbm %s3, %s273
          %s276 = sshll.u32 %s268, 4
          %s277 = int_to_ptr.vmem [resolvable:$true] %s276
          %279 = dma.hbm_to_vmem [thread:$0]  %s274, 128, %s277, %s265
        $region32: #{tpu_custom_call.1} parent=15 // pred_fallthru
          _
      $region16: #{tpu_custom_call.1} parent=5 // pred_fallthru
        _
      %p280 = scmp.le.s32.totalorder 1, %s27
      %p281 = scmp.lt.s32.totalorder %s27, 3
      %p282 = pnand %p280, %p281
      %p283 = pneg %p282
      // Predicated region
      $region33: #{tpu_custom_call.1} parent=5 // pred_check
        _
      $region34: #{tpu_custom_call.1} parent=5 // pred_check_branch
        %285 = sbr.rel (%p282) target = $region36
      $region35: #{tpu_custom_call.1} parent=5 // pred_region
        %s286 = ssub.s32 %s27, 1
        %s287 = sand.u32 %s40, 1
        %s288 = scalar_lea.sflag [#allocation3], %s287
        %s289 = sand.u32 %s40, 1
        %s290 = smul.addr %s289, 8
        %s291 = scalar_lea.vmem [#allocation2], %s290
        // Predicated region
        $region37: #{tpu_custom_call.1} parent=35 // pred_check
          %p292 = pneg %p53
        $region38: #{tpu_custom_call.1} parent=35 // pred_check_branch
          %294 = sbr.rel (%p292) target = $region40
        $region39: #{tpu_custom_call.1} parent=35 // pred_region
          %295 = dma.done %s288, 128
        $region40: #{tpu_custom_call.1} parent=35 // pred_fallthru
          _
        %s296 = sand.u32 %s32, 1
        %s297 = scalar_lea.sflag [#allocation6], %s296
        %s298 = sand.u32 %s68, 1
        %s299 = smul.addr %s298, 8
        %s300 = scalar_lea.vmem [#allocation5], %s299
        // Predicated region
        $region41: #{tpu_custom_call.1} parent=35 // pred_check
          %p301 = pneg %p81
        $region42: #{tpu_custom_call.1} parent=35 // pred_check_branch
          %303 = sbr.rel (%p301) target = $region44
        $region43: #{tpu_custom_call.1} parent=35 // pred_region
          %304 = dma.done %s297, 128
        $region44: #{tpu_custom_call.1} parent=35 // pred_fallthru
          _
        %s305 = sand.u32 %s32, 1
        %s306 = scalar_lea.sflag [#allocation6], %s305
        %s307 = sand.u32 %s94, 1
        %s308 = smul.addr %s307, 8
        %s309 = scalar_lea.vmem [#allocation7], %s308
        // Predicated region
        $region45: #{tpu_custom_call.1} parent=35 // pred_check
          %p310 = pneg %p107
        $region46: #{tpu_custom_call.1} parent=35 // pred_check_branch
          %312 = sbr.rel (%p310) target = $region48
        $region47: #{tpu_custom_call.1} parent=35 // pred_region
          %313 = dma.done %s306, 128
        $region48: #{tpu_custom_call.1} parent=35 // pred_fallthru
          _
        %s314 = sand.u32 %s122, 1
        %s315 = scalar_lea.sflag [#allocation9], %s314
        %s316 = sand.u32 %s122, 1
        %s317 = smul.addr %s316, 8
        %s318 = scalar_lea.vmem [#allocation8], %s317
        // Predicated region
        $region49: #{tpu_custom_call.1} parent=35 // pred_check
          %p319 = pneg %p135
        $region50: #{tpu_custom_call.1} parent=35 // pred_check_branch
          %321 = sbr.rel (%p319) target = $region52
        $region51: #{tpu_custom_call.1} parent=35 // pred_region
          %322 = dma.done %s315, 128
        $region52: #{tpu_custom_call.1} parent=35 // pred_fallthru
          _
        %s323 = sand.u32 %s40, 1
        %s324 = scalar_lea.sflag [#allocation3], %s323
        %s325 = sand.u32 %s40, 1
        %s326 = smul.addr %s325, 8
        %s327 = scalar_lea.vmem [#allocation2], %s326
        %p328 = pneg %p53
        %p329 = pneg %p50
        %s330 = sand.u32 %s32, 1
        %s331 = scalar_lea.sflag [#allocation6], %s330
        %s332 = sand.u32 %s68, 1
        %s333 = smul.addr %s332, 8
        %s334 = scalar_lea.vmem [#allocation5], %s333
        %p335 = pneg %p81
        %p336 = pneg %p78
        %s337 = sand.u32 %s32, 1
        %s338 = scalar_lea.sflag [#allocation6], %s337
        %s339 = sand.u32 %s94, 1
        %s340 = smul.addr %s339, 8
        %s341 = scalar_lea.vmem [#allocation7], %s340
        %p342 = pneg %p107
        %p343 = pneg %p104
        %s344 = sand.u32 %s122, 1
        %s345 = scalar_lea.sflag [#allocation9], %s344
        %s346 = sand.u32 %s122, 1
        %s347 = smul.addr %s346, 8
        %s348 = scalar_lea.vmem [#allocation8], %s347
        %p349 = pneg %p135
        %p350 = pneg %p132
        %p351 = pneg %p161
        %p352 = pneg %p158
        %s353 = sand.u32 %s148, 1
        %s354 = scalar_lea.sflag [#allocation4], %s353
        %s355 = sand.u32 %s148, 1
        %s356 = smul.addr %s355, 8
        %s357 = scalar_lea.vmem [#allocation10], %s356
        %p358 = pneg %p187
        %p359 = pneg %p184
        %s360 = sand.u32 %s174, 1
        %s361 = scalar_lea.sflag [#allocation12], %s360
        %s362 = sand.u32 %s174, 1
        %s363 = smul.addr %s362, 8
        %s364 = scalar_lea.vmem [#allocation11], %s363
        %s365 = sadd.s32 %s32, 1
        %s366 = sadd.s32 %s32, 1
        %v367 = vld [vmem:[%s291] sm:$0xff]
        %v368 = vld [vmem:[%s300] sm:$0xff]
        %v369 = vld [vmem:[%s309] sm:$0xff]
        %v370 = vld [vmem:[%s318] sm:$0xff]
        %s371 = smul.u32 %s32, 8
        %s372 = ssub.s32 16, %s371
        %373 = vrot.lane.b32.xlu0 %v367, 127
        %v374 = vpop.permute.xlu0 %373
        %375 = vrot.lane.b32.xlu0 %v368, 127
        %v376 = vpop.permute.xlu0 %375
        %v377 = vadd.f32 %v367, %v374
        %v378 = vadd.f32 %v368, %v376
        %v379 = vsub.f32 %v367, %v374
        %v380 = vsub.f32 %v368, %v376
        %381 = vrot.lane.b32.xlu0 %v377, 126
        %v382 = vpop.permute.xlu0 %381
        %383 = vrot.lane.b32.xlu0 %v378, 126
        %v384 = vpop.permute.xlu0 %383
        %v385 = vadd.f32 %v377, %v382
        %v386 = vadd.f32 %v378, %v384
        %v387 = vsub.f32 %v377, %v382
        %v388 = vsub.f32 %v378, %v384
        %389 = vrot.lane.b32.xlu0 %v385, 124
        %v390 = vpop.permute.xlu0 %389
        %391 = vrot.lane.b32.xlu0 %v386, 124
        %v392 = vpop.permute.xlu0 %391
        %v393 = vadd.f32 %v385, %v390
        %v394 = vadd.f32 %v386, %v392
        %v395 = vsub.f32 %v385, %v390
        %v396 = vsub.f32 %v386, %v392
        %v397 = vrot.slane %v377, 1
        %v398 = vrot.slane %v378, 1
        %v399 = vlaneseq
        %v400 = vshrl.u32 %v399, 7
        %vm401 = vcmp.lt.s32.totalorder %v400, 7
        %v402 = vsel %vm401, %v397, %v398
        %v403 = vsel %vm401, %v398, %v397
        %v404 = vsub.f32 %v377, %v402
        %v405 = vsub.f32 %v378, %v403
        %v406 = vrot.slane %v385, 1
        %v407 = vrot.slane %v386, 1
        %v408 = vsel %vm401, %v406, %v407
        %v409 = vsel %vm401, %v407, %v406
        %v410 = vadd.f32 %v385, %v408
        %v411 = vadd.f32 %v386, %v409
        %v412 = vrot.slane %v410, 2
        %v413 = vrot.slane %v411, 2
        %vm414 = vcmp.lt.s32.totalorder %v400, 6
        %v415 = vsel %vm414, %v412, %v413
        %v416 = vsel %vm414, %v413, %v412
        %v417 = vsub.f32 %v410, %v415
        %v418 = vsub.f32 %v411, %v416
        %v419 = vrot.slane %v393, 1
        %v420 = vrot.slane %v394, 1
        %v421 = vsel %vm401, %v419, %v420
        %v422 = vsel %vm401, %v420, %v419
        %v423 = vadd.f32 %v393, %v421
        %v424 = vadd.f32 %v394, %v422
        %v425 = vrot.slane %v423, 2
        %v426 = vrot.slane %v424, 2
        %v427 = vsel %vm414, %v425, %v426
        %v428 = vsel %vm414, %v426, %v425
        %v429 = vadd.f32 %v423, %v427
        %v430 = vadd.f32 %v424, %v428
        %v431 = vrot.slane %v429, 4
        %v432 = vrot.slane %v430, 4
        %vm433 = vcmp.lt.s32.totalorder %v400, 4
        %v434 = vsel %vm433, %v431, %v432
        %v435 = vsub.f32 %v429, %v434
        %v436 = vrot.slane %v379, 1
        %v437 = vrot.slane %v380, 1
        %v438 = vsel %vm401, %v436, %v437
        %v439 = vsel %vm401, %v437, %v436
        %v440 = vadd.f32 %v379, %v438
        %v441 = vadd.f32 %v380, %v439
        %v442 = vrot.slane %v387, 1
        %v443 = vrot.slane %v388, 1
        %v444 = vsel %vm401, %v442, %v443
        %v445 = vsel %vm401, %v443, %v442
        %v446 = vadd.f32 %v387, %v444
        %v447 = vadd.f32 %v388, %v445
        %v448 = vrot.slane %v446, 2
        %v449 = vrot.slane %v447, 2
        %v450 = vsel %vm414, %v448, %v449
        %v451 = vsel %vm414, %v449, %v448
        %v452 = vadd.f32 %v446, %v450
        %v453 = vadd.f32 %v447, %v451
        %v454 = vrot.slane %v395, 1
        %v455 = vrot.slane %v396, 1
        %v456 = vsel %vm401, %v454, %v455
        %v457 = vsel %vm401, %v455, %v454
        %v458 = vadd.f32 %v395, %v456
        %v459 = vadd.f32 %v396, %v457
        %v460 = vrot.slane %v458, 2
        %v461 = vrot.slane %v459, 2
        %v462 = vsel %vm414, %v460, %v461
        %v463 = vsel %vm414, %v461, %v460
        %v464 = vadd.f32 %v458, %v462
        %v465 = vadd.f32 %v459, %v463
        %v466 = vrot.slane %v464, 4
        %v467 = vrot.slane %v465, 4
        %v468 = vsel %vm433, %v466, %v467
        %v469 = vadd.f32 %v464, %v468
        %470 = vrot.lane.b32.xlu0 %v369, 127
        %v471 = vpop.permute.xlu0 %470
        %472 = vrot.lane.b32.xlu0 %v370, 127
        %v473 = vpop.permute.xlu0 %472
        %v474 = vadd.f32 %v369, %v471
        %v475 = vadd.f32 %v370, %v473
        %v476 = vsub.f32 %v369, %v471
        %v477 = vsub.f32 %v370, %v473
        %478 = vrot.lane.b32.xlu0 %v474, 126
        %v479 = vpop.permute.xlu0 %478
        %480 = vrot.lane.b32.xlu0 %v475, 126
        %v481 = vpop.permute.xlu0 %480
        %v482 = vadd.f32 %v474, %v479
        %v483 = vadd.f32 %v475, %v481
        %v484 = vsub.f32 %v474, %v479
        %v485 = vsub.f32 %v475, %v481
        %486 = vrot.lane.b32.xlu0 %v482, 124
        %v487 = vpop.permute.xlu0 %486
        %488 = vrot.lane.b32.xlu0 %v483, 124
        %v489 = vpop.permute.xlu0 %488
        %v490 = vadd.f32 %v482, %v487
        %v491 = vadd.f32 %v483, %v489
        %v492 = vsub.f32 %v482, %v487
        %v493 = vsub.f32 %v483, %v489
        %v494 = vrot.slane %v474, 1
        %v495 = vrot.slane %v475, 1
        %v496 = vsel %vm401, %v494, %v495
        %v497 = vsel %vm401, %v495, %v494
        %v498 = vsub.f32 %v474, %v496
        %v499 = vsub.f32 %v475, %v497
        %v500 = vrot.slane %v482, 1
        %v501 = vrot.slane %v483, 1
        %v502 = vsel %vm401, %v500, %v501
        %v503 = vsel %vm401, %v501, %v500
        %v504 = vadd.f32 %v482, %v502
        %v505 = vadd.f32 %v483, %v503
        %v506 = vrot.slane %v504, 2
        %v507 = vrot.slane %v505, 2
        %v508 = vsel %vm414, %v506, %v507
        %v509 = vsel %vm414, %v507, %v506
        %v510 = vsub.f32 %v504, %v508
        %v511 = vsub.f32 %v505, %v509
        %v512 = vrot.slane %v490, 1
        %v513 = vrot.slane %v491, 1
        %v514 = vsel %vm401, %v512, %v513
        %v515 = vsel %vm401, %v513, %v512
        %v516 = vadd.f32 %v490, %v514
        %v517 = vadd.f32 %v491, %v515
        %v518 = vrot.slane %v516, 2
        %v519 = vrot.slane %v517, 2
        %v520 = vsel %vm414, %v518, %v519
        %v521 = vsel %vm414, %v519, %v518
        %v522 = vadd.f32 %v516, %v520
        %v523 = vadd.f32 %v517, %v521
        %v524 = vrot.slane %v522, 4
        %v525 = vrot.slane %v523, 4
        %v526 = vsel %vm433, %v524, %v525
        %v527 = vsub.f32 %v522, %v526
        %v528 = vrot.slane %v476, 1
        %v529 = vrot.slane %v477, 1
        %v530 = vsel %vm401, %v528, %v529
        %v531 = vsel %vm401, %v529, %v528
        %v532 = vadd.f32 %v476, %v530
        %v533 = vadd.f32 %v477, %v531
        %v534 = vrot.slane %v484, 1
        %v535 = vrot.slane %v485, 1
        %v536 = vsel %vm401, %v534, %v535
        %v537 = vsel %vm401, %v535, %v534
        %v538 = vadd.f32 %v484, %v536
        %v539 = vadd.f32 %v485, %v537
        %v540 = vrot.slane %v538, 2
        %v541 = vrot.slane %v539, 2
        %v542 = vsel %vm414, %v540, %v541
        %v543 = vsel %vm414, %v541, %v540
        %v544 = vadd.f32 %v538, %v542
        %v545 = vadd.f32 %v539, %v543
        %v546 = vrot.slane %v492, 1
        %v547 = vrot.slane %v493, 1
        %v548 = vsel %vm401, %v546, %v547
        %v549 = vsel %vm401, %v547, %v546
        %v550 = vadd.f32 %v492, %v548
        %v551 = vadd.f32 %v493, %v549
        %v552 = vrot.slane %v550, 2
        %v553 = vrot.slane %v551, 2
        %v554 = vsel %vm414, %v552, %v553
        %v555 = vsel %vm414, %v553, %v552
        %v556 = vadd.f32 %v550, %v554
        %v557 = vadd.f32 %v551, %v555
        %v558 = vrot.slane %v556, 4
        %v559 = vrot.slane %v557, 4
        %v560 = vsel %vm433, %v558, %v559
        %v561 = vadd.f32 %v556, %v560
        %v562 = vmul.f32 %v404, %v498
        %v563 = vmul.f32 %v405, %v499
        %v564 = vand.u32 2147483647, %v562
        %v565 = vand.u32 2147483647, %v563
        %v566 = vmul.f32 %v564, 2.0
        %v567 = vmul.f32 %v565, 2.0
        %v568 = vadd.f32 %v566, 0.0225
        %v569 = vadd.f32 %v567, 0.0225
        %v570 = vmul.f32 %v404, %v404
        %v571 = vmul.f32 %v405, %v405
        %v572 = vmul.f32 %v498, %v498
        %v573 = vmul.f32 %v499, %v499
        %v574 = vadd.f32 %v570, %v572
        %v575 = vadd.f32 %v571, %v573
        %v576 = vadd.f32 %v574, 0.0225
        %v577 = vadd.f32 %v575, 0.0225
        %v578 = vrcp.pop %v576
        %v579 = vrcp.pop %v577
        %v580 = vmul.f32 %v568, %v578
        %v581 = vmul.f32 %v569, %v579
        %v582 = vrot.slane %v580, 3
        %v583 = vrot.slane %v581, 3
        %vm584 = vcmp.lt.s32.totalorder %v400, 5
        %v585 = vsel %vm584, %v582, %v583
        %586 = vrot.lane.b32.xlu0 %v585, 125
        %v587 = vpop.permute.xlu0 %586
        %v588 = vmul.f32 %v417, %v510
        %v589 = vmul.f32 %v418, %v511
        %v590 = vand.u32 2147483647, %v588
        %v591 = vand.u32 2147483647, %v589
        %v592 = vmul.f32 %v590, 2.0
        %v593 = vmul.f32 %v591, 2.0
        %v594 = vadd.f32 %v592, 0.0225
        %v595 = vadd.f32 %v593, 0.0225
        %v596 = vmul.f32 %v417, %v417
        %v597 = vmul.f32 %v418, %v418
        %v598 = vmul.f32 %v510, %v510
        %v599 = vmul.f32 %v511, %v511
        %v600 = vadd.f32 %v596, %v598
        %v601 = vadd.f32 %v597, %v599
        %v602 = vadd.f32 %v600, 0.0225
        %v603 = vadd.f32 %v601, 0.0225
        %v604 = vrcp.pop %v602
        %v605 = vrcp.pop %v603
        %v606 = vmul.f32 %v594, %v604
        %v607 = vmul.f32 %v595, %v605
        %v608 = vrot.slane %v606, 2
        %v609 = vrot.slane %v607, 2
        %v610 = vsel %vm414, %v608, %v609
        %611 = vrot.lane.b32.xlu0 %v610, 126
        %v612 = vpop.permute.xlu0 %611
        %v613 = vadd.f32 %v587, %v612
        %v614 = vmul.f32 %v613, 1.05
        %v615 = vtanh.pop %v614
        %v616 = vmul.f32 %v615, 0.5
        %v617 = vadd.f32 %v616, 0.5
        %v618 = vand.u32 2147483647, %v435
        %v619 = vand.u32 2147483647, %v527
        %v620 = vmax.f32 %v618, %v619
        %v621 = vmul.f32 %v440, %v532
        %v622 = vmul.f32 %v441, %v533
        %v623 = vand.u32 2147483647, %v621
        %v624 = vand.u32 2147483647, %v622
        %v625 = vmul.f32 %v623, 2.0
        %v626 = vmul.f32 %v624, 2.0
        %v627 = vadd.f32 %v625, 0.0225
        %v628 = vadd.f32 %v626, 0.0225
        %v629 = vmul.f32 %v440, %v440
        %v630 = vmul.f32 %v441, %v441
        %v631 = vmul.f32 %v532, %v532
        %v632 = vmul.f32 %v533, %v533
        %v633 = vadd.f32 %v629, %v631
        %v634 = vadd.f32 %v630, %v632
        %v635 = vadd.f32 %v633, 0.0225
        %v636 = vadd.f32 %v634, 0.0225
        %v637 = vrcp.pop %v635
        %v638 = vrcp.pop %v636
        %v639 = vmul.f32 %v627, %v637
        %v640 = vmul.f32 %v628, %v638
        %v641 = vrot.slane %v639, 3
        %v642 = vrot.slane %v640, 3
        %v643 = vsel %vm584, %v641, %v642
        %644 = vrot.lane.b32.xlu0 %v643, 125
        %v645 = vpop.permute.xlu0 %644
        %v646 = vmul.f32 %v452, %v544
        %v647 = vmul.f32 %v453, %v545
        %v648 = vand.u32 2147483647, %v646
        %v649 = vand.u32 2147483647, %v647
        %v650 = vmul.f32 %v648, 2.0
        %v651 = vmul.f32 %v649, 2.0
        %v652 = vadd.f32 %v650, 0.0225
        %v653 = vadd.f32 %v651, 0.0225
        %v654 = vmul.f32 %v452, %v452
        %v655 = vmul.f32 %v453, %v453
        %v656 = vmul.f32 %v544, %v544
        %v657 = vmul.f32 %v545, %v545
        %v658 = vadd.f32 %v654, %v656
        %v659 = vadd.f32 %v655, %v657
        %v660 = vadd.f32 %v658, 0.0225
        %v661 = vadd.f32 %v659, 0.0225
        %v662 = vrcp.pop %v660
        %v663 = vrcp.pop %v661
        %v664 = vmul.f32 %v652, %v662
        %v665 = vmul.f32 %v653, %v663
        %v666 = vrot.slane %v664, 2
        %v667 = vrot.slane %v665, 2
        %v668 = vsel %vm414, %v666, %v667
        %669 = vrot.lane.b32.xlu0 %v668, 126
        %v670 = vpop.permute.xlu0 %669
        %v671 = vadd.f32 %v645, %v670
        %v672 = vmul.f32 %v671, 1.05
        %v673 = vtanh.pop %v672
        %v674 = vmul.f32 %v673, 0.5
        %v675 = vadd.f32 %v674, 0.5
        %v676 = vand.u32 2147483647, %v469
        %v677 = vand.u32 2147483647, %v561
        %v678 = vmax.f32 %v676, %v677
        %v679 = vlaneseq
        %v680 = vand.u32 %v679, 127
        %v681 = vstv %s372
        %vm682 = vcmp.lt.s32.totalorder %v400, %v681
        %vm683 = vcmp.lt.s32.totalorder %v680, 16
        %vm684 = vmand %vm682, %vm683
        %v685 = vmul.f32 %v617, %v620
        %v686 = vmul.f32 %v675, %v678
        %v687 = vadd.f32 %v685, %v686
        %v688 = vsel %vm684, %v687, 0.0
        %v689 = vadd.f32 %v620, %v678
        %v690 = vsel %vm684, %v689, 0.0
        %691 = vst [vmem:[%s357] sm:$0xff] %v688
        %692 = vst [vmem:[%s364] sm:$0xff] %v690
        %s693 = sand.u32 %s148, 1
        %s694 = scalar_lea.sflag [#allocation4], %s693
        %s695 = sand.u32 %s148, 1
        %s696 = smul.addr %s695, 8
        %s697 = scalar_lea.vmem [#allocation10], %s696
        %s698 = sand.u32 %s174, 1
        %s699 = scalar_lea.sflag [#allocation12], %s698
        %s700 = sand.u32 %s174, 1
        %s701 = smul.addr %s700, 8
        %s702 = scalar_lea.vmem [#allocation11], %s701
        // Predicated region
        $region53: #{tpu_custom_call.1} parent=35 // pred_check
          %p703 = pneg %p158
        $region54: #{tpu_custom_call.1} parent=35 // pred_check_branch
          %705 = sbr.rel (%p703) target = $region56
        $region55: #{tpu_custom_call.1} parent=35 // pred_region
          %s707 = ssub.s32 128, 128
          %708 = vsyncadd %s694, %s707
          %s709 = smul.addr %s32, 128
          %s710 = scalar_lea.hbm %s4, %s709
          %s712 = sshll.u32 %s697, 4
          %s713 = int_to_ptr.vmem [resolvable:$true] %s712
          %715 = dma.vmem_to_hbm [thread:$0]  %s713, 128, %s710, %s694
        $region56: #{tpu_custom_call.1} parent=35 // pred_fallthru
          _
        // Predicated region
        $region57: #{tpu_custom_call.1} parent=35 // pred_check
          %p716 = pneg %p184
        $region58: #{tpu_custom_call.1} parent=35 // pred_check_branch
          %718 = sbr.rel (%p716) target = $region60
        $region59: #{tpu_custom_call.1} parent=35 // pred_region
          %s720 = ssub.s32 128, 128
          %721 = vsyncadd %s699, %s720
          %s722 = smul.addr %s32, 128
          %s723 = scalar_lea.hbm %s5, %s722
          %s725 = sshll.u32 %s702, 4
          %s726 = int_to_ptr.vmem [resolvable:$true] %s725
          %728 = dma.vmem_to_hbm [thread:$0]  %s726, 128, %s723, %s699
        $region60: #{tpu_custom_call.1} parent=35 // pred_fallthru
          _
      $region36: #{tpu_custom_call.1} parent=5 // pred_fallthru
        _
      %p729 = scmp.le.s32.totalorder 2, %s27
      // Predicated region
      $region61: #{tpu_custom_call.1} parent=5 // pred_check
        %p730 = pneg %p729
      $region62: #{tpu_custom_call.1} parent=5 // pred_check_branch
        %732 = sbr.rel (%p730) target = $region64
      $region63: #{tpu_custom_call.1} parent=5 // pred_region
        %s733 = ssub.s32 %s27, 2
        // Predicated region
        $region65: #{tpu_custom_call.1} parent=63 // pred_check
          %p734 = pneg %p164
        $region66: #{tpu_custom_call.1} parent=63 // pred_check_branch
          %736 = sbr.rel (%p734) target = $region68
        $region67: #{tpu_custom_call.1} parent=63 // pred_region
          %s737 = sand.u32 %s149, 1
          %s738 = scalar_lea.sflag [#allocation4], %s737
          %s739 = sand.u32 %s149, 1
          %s740 = smul.addr %s739, 8
          %s741 = scalar_lea.vmem [#allocation10], %s740
          %742 = dma.done %s738, 128
        $region68: #{tpu_custom_call.1} parent=63 // pred_fallthru
          _
        // Predicated region
        $region69: #{tpu_custom_call.1} parent=63 // pred_check
          %p743 = pneg %p190
        $region70: #{tpu_custom_call.1} parent=63 // pred_check_branch
          %745 = sbr.rel (%p743) target = $region72
        $region71: #{tpu_custom_call.1} parent=63 // pred_region
          %s746 = sand.u32 %s175, 1
          %s747 = scalar_lea.sflag [#allocation12], %s746
          %s748 = sand.u32 %s175, 1
          %s749 = smul.addr %s748, 8
          %s750 = scalar_lea.vmem [#allocation11], %s749
          %751 = dma.done %s747, 128
        $region72: #{tpu_custom_call.1} parent=63 // pred_fallthru
          _
      $region64: #{tpu_custom_call.1} parent=5 // pred_fallthru
        _
    $region6: #{tpu_custom_call.1} parent=1 // loop_footer
      %s31 = sadd.s32 1, %s27
    $region7: #{tpu_custom_call.1} parent=1 // loop_footer_branch
      %26 = sbr.rel target = $region3
    $region8: #{tpu_custom_call.1} parent=1 // loop_exit
      _
    %752 = vsyncpa [#allocation3], 1
    %s753 = scalar_lea.sflag [#allocation3], 1
    %754 = vsyncpa %s753, 1
    %755 = vsyncpa [#allocation6], 1
    %s756 = scalar_lea.sflag [#allocation6], 1
    %757 = vsyncpa %s756, 1
    %758 = vsyncpa [#allocation9], 1
    %s759 = scalar_lea.sflag [#allocation9], 1
    %760 = vsyncpa %s759, 1
    %761 = vsyncpa [#allocation4], 1
    %s762 = scalar_lea.sflag [#allocation4], 1
    %763 = vsyncpa %s762, 1
    %764 = vsyncpa [#allocation12], 1
    %s765 = scalar_lea.sflag [#allocation12], 1
    %766 = vsyncpa %s765, 1

</llo_original>
